<compile_context>
chip_gen: v7x
topology: tpu7x:2x2x1
jax: 0.10.0
libtpu: 0.0.40
codegen_flags: <defaults>
</compile_context>

<pallas_src>
import jax
import jax.numpy as jnp
from jax.experimental import pallas as pl
from jax.experimental.pallas import tpu as pltpu

HIDDEN = 128


def _round_up(x, m):
    return ((x + m - 1) // m) * m


def _policy_mlp_kernel(x_ref, w1_ref, b1_ref, w2_ref, b2_ref,
                       w3_ref, b3_ref, w4_ref, b4_ref, out_ref):
    # x arrives f32; cast to bf16 on the VPU right before the MXU.
    x = x_ref[...].astype(jnp.bfloat16)

    h = jnp.dot(x, w1_ref[...],
                preferred_element_type=jnp.float32) + b1_ref[...]
    h = jnp.maximum(h, 0.0)

    h = jnp.dot(h.astype(jnp.bfloat16), w2_ref[...],
                preferred_element_type=jnp.float32) + b2_ref[...]
    h = jnp.maximum(h, 0.0)

    h = jnp.dot(h.astype(jnp.bfloat16), w3_ref[...],
                preferred_element_type=jnp.float32) + b3_ref[...]
    h = jnp.maximum(h, 0.0)

    y = jnp.dot(h.astype(jnp.bfloat16), w4_ref[...],
                preferred_element_type=jnp.float32) + b4_ref[...]

    out_ref[...] = y  # f32, unpadded (out_dim lanes)


def prepare_params(params_f32):
    """One-time conversion to kernel dtypes (call OUTSIDE the per-step path).

    Weights -> bf16 (fan_in, fan_out) MXU operands; biases -> f32 (1, fan_out).
    Keeping these persistent removes the four per-call cast ops of the old glue.
    """
    prepped = {}
    for i in range(1, 5):
        prepped[f"w{i}"] = params_f32[f"w{i}"].astype(jnp.bfloat16)
        prepped[f"b{i}"] = params_f32[f"b{i}"].astype(jnp.float32)
    return prepped


def _choose_batch_tile(batch, batch_tile):
    """Large tiles amortize the ~0.35us per-grid-step overhead; keep >=2 tiles
    when batch allows so v7x's 2 TensorCores both get work; cap at batch_tile."""
    if batch <= 16:
        return _round_up(batch, 8)          # single tiny tile (x is f32 -> 8 ok)
    half = _round_up((batch + 1) // 2, 8)   # aim for at least 2 grid steps
    return min(batch_tile, half)


def policy_network_forward(x, params, *, batch_tile=1024):
    """x: (batch, in_dim) f32.  params: output of prepare_params()."""
    batch, in_dim = x.shape
    out_dim = params["w4"].shape[1]

    tb = _choose_batch_tile(batch, batch_tile)
    # Ragged last block is fine: rows are independent, OOB input rows only
    # produce garbage in OOB output rows, which Pallas masks on writeback.
    grid = (pl.cdiv(batch, tb),)

    # Weights/biases: constant block index -> resident in VMEM across steps.
    def resident(arr):
        return pl.BlockSpec(arr.shape, lambda i: (0, 0))

    flops = 2 * batch * HIDDEN * (in_dim + 2 * HIDDEN + out_dim)
    bytes_accessed = (x.size * 4
                      + sum(params[f"w{i}"].size * 2 for i in range(1, 5))
                      + sum(params[f"b{i}"].size * 4 for i in range(1, 5))
                      + batch * out_dim * 4)

    return pl.pallas_call(
        _policy_mlp_kernel,
        out_shape=jax.ShapeDtypeStruct((batch, out_dim), jnp.float32),
        grid=grid,
        in_specs=[
            # Only x moves with the grid; kept f32 (cast happens in-kernel).
            pl.BlockSpec((tb, in_dim), lambda i: (i, 0)),
            resident(params["w1"]), resident(params["b1"]),
            resident(params["w2"]), resident(params["b2"]),
            resident(params["w3"]), resident(params["b3"]),
            resident(params["w4"]), resident(params["b4"]),
        ],
        out_specs=pl.BlockSpec((tb, out_dim), lambda i: (i, 0)),
        compiler_params=pltpu.CompilerParams(
            dimension_semantics=("parallel",)),
        cost_estimate=pl.CostEstimate(
            flops=flops, transcendentals=0, bytes_accessed=bytes_accessed),
    )(x, params["w1"], params["b1"], params["w2"], params["b2"],
      params["w3"], params["b3"], params["w4"], params["b4"])


def init_params(key, in_dim, out_dim):
    """PyTorch nn.Linear default init U[-1/sqrt(fan_in), 1/sqrt(fan_in)].
    Weights stored transposed: (fan_in, fan_out) so the kernel does x @ W."""
    dims = [(in_dim, HIDDEN), (HIDDEN, HIDDEN), (HIDDEN, HIDDEN), (HIDDEN, out_dim)]
    params = {}
    for i, (fi, fo) in enumerate(dims, start=1):
        key, kw, kb = jax.random.split(key, 3)
        bound = 1.0 / jnp.sqrt(jnp.float32(fi))
        params[f"w{i}"] = jax.random.uniform(kw, (fi, fo), jnp.float32, -bound, bound)
        params[f"b{i}"] = jax.random.uniform(kb, (1, fo), jnp.float32, -bound, bound)
    return params


def reference_forward(x, params_f32):
    """Same math as the kernel: bf16 MXU operands, f32 accumulation, f32 bias/ReLU."""
    h = x.astype(jnp.bfloat16)
    for i in range(1, 4):
        h = jnp.maximum(
            jnp.dot(h, params_f32[f"w{i}"].astype(jnp.bfloat16),
                    preferred_element_type=jnp.float32) + params_f32[f"b{i}"], 0.0)
        h = h.astype(jnp.bfloat16)
    return jnp.dot(h, params_f32["w4"].astype(jnp.bfloat16),
                   preferred_element_type=jnp.float32) + params_f32["b4"]


if __name__ == "__main__":
    key = jax.random.PRNGKey(0)
    in_dim, out_dim = 32, 8            # RL-style shapes: state dim 32, 8 actions
    params_f32 = init_params(key, in_dim, out_dim)
    params = prepare_params(params_f32)   # one-time bf16 weight conversion

    # Small batch: single tile, grid=(1,)
    key, kx = jax.random.split(key)
    x_small = jax.random.normal(kx, (8, in_dim), jnp.float32)
    out_small = jax.block_until_ready(policy_network_forward(x_small, params))
    assert out_small.shape == (8, out_dim)
    assert jnp.allclose(out_small, reference_forward(x_small, params_f32),
                        atol=1e-3, rtol=1e-3), "small-batch mismatch vs reference"

    # Ragged batch: grid=(2,), last block edge-masked (no wrapper-side padding)
    key, kx = jax.random.split(key)
    x_ragged = jax.random.normal(kx, (300, in_dim), jnp.float32)
    out_ragged = jax.block_until_ready(policy_network_forward(x_ragged, params))
    assert out_ragged.shape == (300, out_dim)
    assert jnp.allclose(out_ragged, reference_forward(x_ragged, params_f32),
                        atol=1e-3, rtol=1e-3), "ragged-batch mismatch vs reference"

    # Larger (vectorized-env style) batch: tb=256, grid=(2,) -> both v7x TCs busy
    key, kx = jax.random.split(key)
    x_big = jax.random.normal(kx, (512, in_dim), jnp.float32)
    out_big = jax.block_until_ready(policy_network_forward(x_big, params))
    assert out_big.shape == (512, out_dim)
    assert jnp.allclose(out_big, reference_forward(x_big, params_f32),
                        atol=1e-3, rtol=1e-3), "big-batch mismatch vs reference"

    print("KERNEL_OK")
</pallas_src>

<mosaic_0001>
module attributes {stable_mosaic.version = 11 : i64} {
  func.func @_policy_mlp_kernel(%arg0: i32, %arg1: memref<8x32xf32, #tpu.memory_space<vmem>>, %arg2: memref<32x128xbf16, #tpu.memory_space<vmem>>, %arg3: memref<1x128xf32, #tpu.memory_space<vmem>>, %arg4: memref<128x128xbf16, #tpu.memory_space<vmem>>, %arg5: memref<1x128xf32, #tpu.memory_space<vmem>>, %arg6: memref<128x128xbf16, #tpu.memory_space<vmem>>, %arg7: memref<1x128xf32, #tpu.memory_space<vmem>>, %arg8: memref<128x8xbf16, #tpu.memory_space<vmem>>, %arg9: memref<1x8xf32, #tpu.memory_space<vmem>>, %arg10: memref<8x8xf32, #tpu.memory_space<vmem>>) attributes {dimension_semantics = [#tpu.dimension_semantics<parallel>], iteration_bounds = array<i64: 1>, scalar_prefetch = 0 : i64, scratch_operands = 0 : i64, tpu.core_type = #tpu.core_type<tc>, window_params = [{transform_indices = @transform_0, window_bounds = array<i64: 8, 32>}, {pipeline_mode = #tpu.pipeline_mode<synchronous>, transform_indices = @transform_1, window_bounds = array<i64: 32, 128>}, {pipeline_mode = #tpu.pipeline_mode<synchronous>, transform_indices = @transform_2, window_bounds = array<i64: 1, 128>}, {pipeline_mode = #tpu.pipeline_mode<synchronous>, transform_indices = @transform_3, window_bounds = array<i64: 128, 128>}, {pipeline_mode = #tpu.pipeline_mode<synchronous>, transform_indices = @transform_4, window_bounds = array<i64: 1, 128>}, {pipeline_mode = #tpu.pipeline_mode<synchronous>, transform_indices = @transform_5, window_bounds = array<i64: 128, 128>}, {pipeline_mode = #tpu.pipeline_mode<synchronous>, transform_indices = @transform_6, window_bounds = array<i64: 1, 128>}, {pipeline_mode = #tpu.pipeline_mode<synchronous>, transform_indices = @transform_7, window_bounds = array<i64: 128, 8>}, {pipeline_mode = #tpu.pipeline_mode<synchronous>, transform_indices = @transform_8, window_bounds = array<i64: 1, 8>}, {transform_indices = @transform_9, window_bounds = array<i64: 8, 8>}]} {
    %c0 = arith.constant 0 : index
    %c0_0 = arith.constant 0 : index
    %0 = vector.load %arg1[%c0, %c0_0] : memref<8x32xf32, #tpu.memory_space<vmem>>, vector<8x32xf32>
    %1 = arith.truncf %0 : vector<8x32xf32> to vector<8x32xbf16>
    %c0_1 = arith.constant 0 : index
    %c0_2 = arith.constant 0 : index
    %2 = vector.load %arg2[%c0_1, %c0_2] : memref<32x128xbf16, #tpu.memory_space<vmem>>, vector<32x128xbf16>
    %cst = arith.constant dense<0.000000e+00> : vector<8x128xf32>
    %3 = tpu.matmul %1, %2, %cst {dimension_numbers = #tpu.dot_dimension_numbers<[1], [0], [0], [1], [0, 0, 1, 1], [], []>} : vector<8x32xbf16>, vector<32x128xbf16>, vector<8x128xf32> -> vector<8x128xf32>
    %c0_3 = arith.constant 0 : index
    %c0_4 = arith.constant 0 : index
    %4 = vector.load %arg3[%c0_3, %c0_4] : memref<1x128xf32, #tpu.memory_space<vmem>>, vector<1x128xf32>
    %5 = vector.broadcast %4 : vector<1x128xf32> to vector<8x128xf32>
    %6 = arith.addf %3, %5 : vector<8x128xf32>
    %cst_5 = arith.constant 0.000000e+00 : f32
    %7 = vector.broadcast %cst_5 : f32 to vector<8x128xf32>
    %8 = arith.maximumf %6, %7 : vector<8x128xf32>
    %9 = arith.truncf %8 : vector<8x128xf32> to vector<8x128xbf16>
    %c0_6 = arith.constant 0 : index
    %c0_7 = arith.constant 0 : index
    %10 = vector.load %arg4[%c0_6, %c0_7] : memref<128x128xbf16, #tpu.memory_space<vmem>>, vector<128x128xbf16>
    %cst_8 = arith.constant dense<0.000000e+00> : vector<8x128xf32>
    %11 = tpu.matmul %9, %10, %cst_8 {dimension_numbers = #tpu.dot_dimension_numbers<[1], [0], [0], [1], [0, 0, 1, 1], [], []>} : vector<8x128xbf16>, vector<128x128xbf16>, vector<8x128xf32> -> vector<8x128xf32>
    %c0_9 = arith.constant 0 : index
    %c0_10 = arith.constant 0 : index
    %12 = vector.load %arg5[%c0_9, %c0_10] : memref<1x128xf32, #tpu.memory_space<vmem>>, vector<1x128xf32>
    %13 = vector.broadcast %12 : vector<1x128xf32> to vector<8x128xf32>
    %14 = arith.addf %11, %13 : vector<8x128xf32>
    %cst_11 = arith.constant 0.000000e+00 : f32
    %15 = vector.broadcast %cst_11 : f32 to vector<8x128xf32>
    %16 = arith.maximumf %14, %15 : vector<8x128xf32>
    %17 = arith.truncf %16 : vector<8x128xf32> to vector<8x128xbf16>
    %c0_12 = arith.constant 0 : index
    %c0_13 = arith.constant 0 : index
    %18 = vector.load %arg6[%c0_12, %c0_13] : memref<128x128xbf16, #tpu.memory_space<vmem>>, vector<128x128xbf16>
    %cst_14 = arith.constant dense<0.000000e+00> : vector<8x128xf32>
    %19 = tpu.matmul %17, %18, %cst_14 {dimension_numbers = #tpu.dot_dimension_numbers<[1], [0], [0], [1], [0, 0, 1, 1], [], []>} : vector<8x128xbf16>, vector<128x128xbf16>, vector<8x128xf32> -> vector<8x128xf32>
    %c0_15 = arith.constant 0 : index
    %c0_16 = arith.constant 0 : index
    %20 = vector.load %arg7[%c0_15, %c0_16] : memref<1x128xf32, #tpu.memory_space<vmem>>, vector<1x128xf32>
    %21 = vector.broadcast %20 : vector<1x128xf32> to vector<8x128xf32>
    %22 = arith.addf %19, %21 : vector<8x128xf32>
    %cst_17 = arith.constant 0.000000e+00 : f32
    %23 = vector.broadcast %cst_17 : f32 to vector<8x128xf32>
    %24 = arith.maximumf %22, %23 : vector<8x128xf32>
    %25 = arith.truncf %24 : vector<8x128xf32> to vector<8x128xbf16>
    %c0_18 = arith.constant 0 : index
    %c0_19 = arith.constant 0 : index
    %26 = vector.load %arg8[%c0_18, %c0_19] : memref<128x8xbf16, #tpu.memory_space<vmem>>, vector<128x8xbf16>
    %cst_20 = arith.constant dense<0.000000e+00> : vector<8x8xf32>
    %27 = tpu.matmul %25, %26, %cst_20 {dimension_numbers = #tpu.dot_dimension_numbers<[1], [0], [0], [1], [0, 0, 1, 1], [], []>} : vector<8x128xbf16>, vector<128x8xbf16>, vector<8x8xf32> -> vector<8x8xf32>
    %c0_21 = arith.constant 0 : index
    %c0_22 = arith.constant 0 : index
    %28 = vector.load %arg9[%c0_21, %c0_22] : memref<1x8xf32, #tpu.memory_space<vmem>>, vector<1x8xf32>
    %29 = vector.broadcast %28 : vector<1x8xf32> to vector<8x8xf32>
    %30 = arith.addf %27, %29 : vector<8x8xf32>
    %c0_23 = arith.constant 0 : index
    %c0_24 = arith.constant 0 : index
    %31 = vector.load %arg10[%c0_23, %c0_24] : memref<8x8xf32, #tpu.memory_space<vmem>>, vector<8x8xf32>
    tpu.vector_store %arg10[%c0_23, %c0_24], %30 {strides = array<i32>} : memref<8x8xf32, #tpu.memory_space<vmem>>, vector<8x8xf32>,
    return
  }
  func.func @transform_0(%arg0: i32) -> (i32, i32) {
    %c0_i32 = arith.constant 0 : i32
    %c0_i32_0 = arith.constant 0 : i32
    return %arg0, %c0_i32 : i32, i32
  }
  func.func @transform_1(%arg0: i32) -> (i32, i32) {
    %c0_i32 = arith.constant 0 : i32
    %c0_i32_0 = arith.constant 0 : i32
    %c0_i32_1 = arith.constant 0 : i32
    return %c0_i32, %c0_i32_0 : i32, i32
  }
  func.func @transform_2(%arg0: i32) -> (i32, i32) {
    %c0_i32 = arith.constant 0 : i32
    %c0_i32_0 = arith.constant 0 : i32
    %c0_i32_1 = arith.constant 0 : i32
    return %c0_i32, %c0_i32_0 : i32, i32
  }
  func.func @transform_3(%arg0: i32) -> (i32, i32) {
    %c0_i32 = arith.constant 0 : i32
    %c0_i32_0 = arith.constant 0 : i32
    %c0_i32_1 = arith.constant 0 : i32
    return %c0_i32, %c0_i32_0 : i32, i32
  }
  func.func @transform_4(%arg0: i32) -> (i32, i32) {
    %c0_i32 = arith.constant 0 : i32
    %c0_i32_0 = arith.constant 0 : i32
    %c0_i32_1 = arith.constant 0 : i32
    return %c0_i32, %c0_i32_0 : i32, i32
  }
  func.func @transform_5(%arg0: i32) -> (i32, i32) {
    %c0_i32 = arith.constant 0 : i32
    %c0_i32_0 = arith.constant 0 : i32
    %c0_i32_1 = arith.constant 0 : i32
    return %c0_i32, %c0_i32_0 : i32, i32
  }
  func.func @transform_6(%arg0: i32) -> (i32, i32) {
    %c0_i32 = arith.constant 0 : i32
    %c0_i32_0 = arith.constant 0 : i32
    %c0_i32_1 = arith.constant 0 : i32
    return %c0_i32, %c0_i32_0 : i32, i32
  }
  func.func @transform_7(%arg0: i32) -> (i32, i32) {
    %c0_i32 = arith.constant 0 : i32
    %c0_i32_0 = arith.constant 0 : i32
    %c0_i32_1 = arith.constant 0 : i32
    return %c0_i32, %c0_i32_0 : i32, i32
  }
  func.func @transform_8(%arg0: i32) -> (i32, i32) {
    %c0_i32 = arith.constant 0 : i32
    %c0_i32_0 = arith.constant 0 : i32
    %c0_i32_1 = arith.constant 0 : i32
    return %c0_i32, %c0_i32_0 : i32, i32
  }
  func.func @transform_9(%arg0: i32) -> (i32, i32) {
    %c0_i32 = arith.constant 0 : i32
    %c0_i32_0 = arith.constant 0 : i32
    return %arg0, %c0_i32 : i32, i32
  }
}

</mosaic_0001>

<llo_original>
// kernel: tpu_custom_call.1
$region0: #{tpu_custom_call.1}
  #allocation0 [shape = 'u32[]', space=smem, size = 0x4, offset = 0x4, fixed_abs, tag = 'smem constant byte address 0x4 - core index']
  #allocation1 [shape = 'u32[144,128]{1,0:T(1,128)}', space=vmem, size = 0x12000, scoped, tag = 'internal scratch']
  %s0 = inlined_call_operand.vmem [shape: f32[8,32], index: 0, kind: input, shape index: {}]
  %s1 = inlined_call_operand.hbm [shape: bf16[32,128], index: 1, kind: input, shape index: {}]
  %s2 = inlined_call_operand.vmem [shape: f32[1,128], index: 2, kind: input, shape index: {}]
  %s3 = inlined_call_operand.vmem [shape: bf16[128,128], index: 3, kind: input, shape index: {}]
  %s4 = inlined_call_operand.vmem [shape: f32[1,128], index: 4, kind: input, shape index: {}]
  %s5 = inlined_call_operand.hbm [shape: bf16[128,128], index: 5, kind: input, shape index: {}]
  %s6 = inlined_call_operand.vmem [shape: f32[1,128], index: 6, kind: input, shape index: {}]
  %s7 = inlined_call_operand.vmem [shape: bf16[128,8], index: 7, kind: input, shape index: {}]
  %s8 = inlined_call_operand.vmem [shape: f32[1,8], index: 8, kind: input, shape index: {}]
  %s9 = inlined_call_operand.hbm [shape: f32[8,8], index: 9, kind: output, shape index: {}]
  %s10 = sld [smem:[#allocation0]]
  $region54: #{tpu_custom_call.1} parent=0
    _
  %s12 = ssub.s32 1, %s10
  %s13 = scalar_select 0, %s12, %s10
  $region1: #{tpu_custom_call.1} parent=0
    #allocation2 [shape = 'u8[8192]{0}', space=vmem, size = 0x2000, scoped, tag = 'input window, operand 1, single buffered']
    #allocation3 [shape = 's32[1]{0}', space=sflag, size = 0x4, scoped, tag = 'scoped memory for tpu_custom_call.1']
    #allocation4 [shape = 's32[1]{0}', space=sflag, size = 0x4, scoped, tag = 'scoped memory for tpu_custom_call.1']
    #allocation5 [shape = 'u8[32768]{0}', space=vmem, size = 0x8000, scoped, tag = 'input window, operand 5, single buffered']
    #allocation6 [shape = 's32[1]{0}', space=sflag, size = 0x4, scoped, tag = 'scoped memory for tpu_custom_call.1']
    #allocation7 [shape = 'u8[4096]{0}', space=vmem, size = 0x1000, scoped, tag = 'output window, operand 0, single buffered']
    %14 = vsyncpa [#allocation3], 0
    %15 = vsyncpa [#allocation6], 0
    %16 = vsyncpa [#allocation4], 0
    // Predicated region
    $region2: #{tpu_custom_call.1} parent=1 // pred_check
      _
    $region3: #{tpu_custom_call.1} parent=1 // pred_check_branch
      %18 = sbr.rel (0) target = $region5
    $region4: #{tpu_custom_call.1} parent=1 // pred_region
      _
    $region5: #{tpu_custom_call.1} parent=1 // pred_fallthru
      _
    // Predicated region
    $region6: #{tpu_custom_call.1} parent=1 // pred_check
      _
    $region7: #{tpu_custom_call.1} parent=1 // pred_check_branch
      %20 = sbr.rel (0) target = $region9
    $region8: #{tpu_custom_call.1} parent=1 // pred_region
      %s22 = ssub.s32 256, 256
      %23 = vsyncadd [#allocation3], %s22
      %s24 = sshll.u32 [#allocation2], 4
      %s25 = int_to_ptr.vmem [resolvable:$true] %s24
      %30 = dma.hbm_to_vmem [thread:$0]  %s1, 256, %s25, [#allocation3], 64, 64, 4
    $region9: #{tpu_custom_call.1} parent=1 // pred_fallthru
      _
    // Predicated region
    $region10: #{tpu_custom_call.1} parent=1 // pred_check
      _
    $region11: #{tpu_custom_call.1} parent=1 // pred_check_branch
      %32 = sbr.rel (0) target = $region13
    $region12: #{tpu_custom_call.1} parent=1 // pred_region
      _
    $region13: #{tpu_custom_call.1} parent=1 // pred_fallthru
      _
    // Predicated region
    $region14: #{tpu_custom_call.1} parent=1 // pred_check
      _
    $region15: #{tpu_custom_call.1} parent=1 // pred_check_branch
      %34 = sbr.rel (0) target = $region17
    $region16: #{tpu_custom_call.1} parent=1 // pred_region
      _
    $region17: #{tpu_custom_call.1} parent=1 // pred_fallthru
      _
    // Predicated region
    $region18: #{tpu_custom_call.1} parent=1 // pred_check
      _
    $region19: #{tpu_custom_call.1} parent=1 // pred_check_branch
      %36 = sbr.rel (0) target = $region21
    $region20: #{tpu_custom_call.1} parent=1 // pred_region
      _
    $region21: #{tpu_custom_call.1} parent=1 // pred_fallthru
      _
    // Predicated region
    $region22: #{tpu_custom_call.1} parent=1 // pred_check
      _
    $region23: #{tpu_custom_call.1} parent=1 // pred_check_branch
      %38 = sbr.rel (0) target = $region25
    $region24: #{tpu_custom_call.1} parent=1 // pred_region
      %s40 = ssub.s32 1024, 1024
      %41 = vsyncadd [#allocation6], %s40
      %s42 = sshll.u32 [#allocation5], 4
      %s43 = int_to_ptr.vmem [resolvable:$true] %s42
      %48 = dma.hbm_to_vmem [thread:$0]  %s5, 1024, %s43, [#allocation6], 64, 64, 4
    $region25: #{tpu_custom_call.1} parent=1 // pred_fallthru
      _
    // Predicated region
    $region26: #{tpu_custom_call.1} parent=1 // pred_check
      _
    $region27: #{tpu_custom_call.1} parent=1 // pred_check_branch
      %50 = sbr.rel (0) target = $region29
    $region28: #{tpu_custom_call.1} parent=1 // pred_region
      _
    $region29: #{tpu_custom_call.1} parent=1 // pred_fallthru
      _
    // Predicated region
    $region30: #{tpu_custom_call.1} parent=1 // pred_check
      _
    $region31: #{tpu_custom_call.1} parent=1 // pred_check_branch
      %52 = sbr.rel (0) target = $region33
    $region32: #{tpu_custom_call.1} parent=1 // pred_region
      _
    $region33: #{tpu_custom_call.1} parent=1 // pred_fallthru
      _
    // Predicated region
    $region34: #{tpu_custom_call.1} parent=1 // pred_check
      _
    $region35: #{tpu_custom_call.1} parent=1 // pred_check_branch
      %54 = sbr.rel (0) target = $region37
    $region36: #{tpu_custom_call.1} parent=1 // pred_region
      _
    $region37: #{tpu_custom_call.1} parent=1 // pred_fallthru
      _
    // Predicated region
    $region38: #{tpu_custom_call.1} parent=1 // pred_check
      _
    $region39: #{tpu_custom_call.1} parent=1 // pred_check_branch
      %56 = sbr.rel (0) target = $region41
    $region40: #{tpu_custom_call.1} parent=1 // pred_region
      %57 = dma.done [#allocation3], 256
    $region41: #{tpu_custom_call.1} parent=1 // pred_fallthru
      _
    // Predicated region
    $region42: #{tpu_custom_call.1} parent=1 // pred_check
      _
    $region43: #{tpu_custom_call.1} parent=1 // pred_check_branch
      %59 = sbr.rel (0) target = $region45
    $region44: #{tpu_custom_call.1} parent=1 // pred_region
      %60 = dma.done [#allocation6], 1024
    $region45: #{tpu_custom_call.1} parent=1 // pred_fallthru
      _
    %v62 = vld [vmem:[%s0] sm:$0xff]
    %v63 = vpack.c.bf16 %v62, %v62
    %v64 = vld [vmem:[#allocation2] sm:$0xf]
    %v65 = vld [vmem:[#allocation2 + $0x4] sm:$0xf]
    %v66 = vld [vmem:[#allocation2 + $0x8] sm:$0xf]
    %v67 = vld [vmem:[#allocation2 + $0xc] sm:$0xf]
    %v68 = vld [vmem:[%s2] sm:$0x1]
    %v70 = vlaneseq
    %v71 = vshrl.u32 %v70, 7
    %v72 = vsub.s32 0, %v71
    %v73 = vrot.slane %v68, %v72
    %v79 = vunpack.c.l.b16 %v64
    %v80 = vunpack.c.l.b16 %v65
    %v81 = vunpack.c.l.b16 %v66
    %v82 = vunpack.c.l.b16 %v67
    %v83 = vpack.c.b16 %v80, %v79
    %v84 = vpack.c.b16 %v82, %v81
    %vm87 = vcmask 261120
    %v89 = vsel %vm87, %v63, 0
    %91 = vmatprep.subr.bf16.mxu0 0
    %92 = vmatpush1.bf16.msra.mxu0 %v83
    %93 = vmatprep.subr.bf16.mxu0 0
    %94 = vmatpush1.bf16.msra.mxu0 %v84
    %95 = vmatprep.subr.bf16.mxu0 0
    %96 = vmatpush1.bf16.msra.mxu0 0
    %97 = vmatprep.subr.bf16.mxu0 0
    %98 = vmatpush1.bf16.msra.mxu0 0
    %99 = vmatprep.subr.bf16.mxu0 0
    %100 = vmatpush1.bf16.msra.mxu0 0
    %101 = vmatprep.subr.bf16.mxu0 0
    %102 = vmatpush1.bf16.msra.mxu0 0
    %103 = vmatprep.subr.bf16.mxu0 0
    %104 = vmatpush1.bf16.msra.mxu0 0
    %105 = vmatprep.subr.bf16.mxu0 0
    %106 = vmatpush1.bf16.msra.mxu0 0
    %107 = vmatprep.subr.bf16.mxu0 0
    %108 = vmatpush1.bf16.msra.mxu0 0
    %109 = vmatprep.subr.bf16.mxu0 0
    %110 = vmatpush1.bf16.msra.mxu0 0
    %111 = vmatprep.subr.bf16.mxu0 0
    %112 = vmatpush1.bf16.msra.mxu0 0
    %113 = vmatprep.subr.bf16.mxu0 0
    %114 = vmatpush1.bf16.msra.mxu0 0
    %115 = vmatprep.subr.bf16.mxu0 0
    %116 = vmatpush1.bf16.msra.mxu0 0
    %117 = vmatprep.subr.bf16.mxu0 0
    %118 = vmatpush1.bf16.msra.mxu0 0
    %119 = vmatprep.subr.bf16.mxu0 0
    %120 = vmatpush1.bf16.msra.mxu0 0
    %121 = vmatprep.subr.bf16.mxu0 0
    %122 = vmatpush1.bf16.msra.mxu0 0
    %123 = vmatprep.mubr.bf16.mxu0 0
    %124 = vmatmul.mubr.bf16.gmra.mrb[0].mxu0 %v89
    %v125 = vpop.f32.mrb[0].mxu0
    %v126 = vadd.f32 %v73, %v125
    %v127 = vpop.f32.mrb[0].mxu0
    %v128 = vpop.f32.mrb[0].mxu0
    %v129 = vpop.f32.mrb[0].mxu0
    %130 = vdwg.mxu0
    %v131 = vmax.f32 %v126, 0.0
    %v132 = vpack.c.bf16 %v131, %v131
    %v133 = vld [vmem:[%s3] sm:$0xf]
    %v134 = vld [vmem:[%s3 + $0x4] sm:$0xf]
    %v135 = vld [vmem:[%s3 + $0x8] sm:$0xf]
    %v136 = vld [vmem:[%s3 + $0xc] sm:$0xf]
    %v137 = vld [vmem:[%s3 + $0x10] sm:$0xf]
    %v138 = vld [vmem:[%s3 + $0x14] sm:$0xf]
    %v139 = vld [vmem:[%s3 + $0x18] sm:$0xf]
    %v140 = vld [vmem:[%s3 + $0x1c] sm:$0xf]
    %v141 = vld [vmem:[%s3 + $0x20] sm:$0xf]
    %v142 = vld [vmem:[%s3 + $0x24] sm:$0xf]
    %v143 = vld [vmem:[%s3 + $0x28] sm:$0xf]
    %v144 = vld [vmem:[%s3 + $0x2c] sm:$0xf]
    %v145 = vld [vmem:[%s3 + $0x30] sm:$0xf]
    %v146 = vld [vmem:[%s3 + $0x34] sm:$0xf]
    %v147 = vld [vmem:[%s3 + $0x38] sm:$0xf]
    %v148 = vld [vmem:[%s3 + $0x3c] sm:$0xf]
    %v149 = vld [vmem:[%s4] sm:$0x1]
    %v151 = vlaneseq
    %v152 = vshrl.u32 %v151, 7
    %v153 = vsub.s32 0, %v152
    %v154 = vrot.slane %v149, %v153
    %v172 = vunpack.c.l.b16 %v133
    %v173 = vunpack.c.l.b16 %v134
    %v174 = vunpack.c.l.b16 %v135
    %v175 = vunpack.c.l.b16 %v136
    %v176 = vunpack.c.l.b16 %v137
    %v177 = vunpack.c.l.b16 %v138
    %v178 = vunpack.c.l.b16 %v139
    %v179 = vunpack.c.l.b16 %v140
    %v180 = vunpack.c.l.b16 %v141
    %v181 = vunpack.c.l.b16 %v142
    %v182 = vunpack.c.l.b16 %v143
    %v183 = vunpack.c.l.b16 %v144
    %v184 = vunpack.c.l.b16 %v145
    %v185 = vunpack.c.l.b16 %v146
    %v186 = vunpack.c.l.b16 %v147
    %v187 = vunpack.c.l.b16 %v148
    %v188 = vpack.c.b16 %v173, %v172
    %v189 = vpack.c.b16 %v175, %v174
    %v190 = vpack.c.b16 %v177, %v176
    %v191 = vpack.c.b16 %v179, %v178
    %v192 = vpack.c.b16 %v181, %v180
    %v193 = vpack.c.b16 %v183, %v182
    %v194 = vpack.c.b16 %v185, %v184
    %v195 = vpack.c.b16 %v187, %v186
    %204 = vmatprep.subr.bf16.mxu0 0
    %205 = vmatpush1.bf16.msra.mxu0 %v188
    %206 = vmatprep.subr.bf16.mxu0 0
    %207 = vmatpush1.bf16.msra.mxu0 %v189
    %208 = vmatprep.subr.bf16.mxu0 0
    %209 = vmatpush1.bf16.msra.mxu0 %v190
    %210 = vmatprep.subr.bf16.mxu0 0
    %211 = vmatpush1.bf16.msra.mxu0 %v191
    %212 = vmatprep.subr.bf16.mxu0 0
    %213 = vmatpush1.bf16.msra.mxu0 %v192
    %214 = vmatprep.subr.bf16.mxu0 0
    %215 = vmatpush1.bf16.msra.mxu0 %v193
    %216 = vmatprep.subr.bf16.mxu0 0
    %217 = vmatpush1.bf16.msra.mxu0 %v194
    %218 = vmatprep.subr.bf16.mxu0 0
    %219 = vmatpush1.bf16.msra.mxu0 %v195
    %220 = vmatprep.subr.bf16.mxu0 0
    %221 = vmatpush1.bf16.msra.mxu0 0
    %222 = vmatprep.subr.bf16.mxu0 0
    %223 = vmatpush1.bf16.msra.mxu0 0
    %224 = vmatprep.subr.bf16.mxu0 0
    %225 = vmatpush1.bf16.msra.mxu0 0
    %226 = vmatprep.subr.bf16.mxu0 0
    %227 = vmatpush1.bf16.msra.mxu0 0
    %228 = vmatprep.subr.bf16.mxu0 0
    %229 = vmatpush1.bf16.msra.mxu0 0
    %230 = vmatprep.subr.bf16.mxu0 0
    %231 = vmatpush1.bf16.msra.mxu0 0
    %232 = vmatprep.subr.bf16.mxu0 0
    %233 = vmatpush1.bf16.msra.mxu0 0
    %234 = vmatprep.subr.bf16.mxu0 0
    %235 = vmatpush1.bf16.msra.mxu0 0
    %236 = vmatprep.mubr.bf16.mxu0 0
    %237 = vmatmul.mubr.bf16.gmra.mrb[0].mxu0 %v132
    %v238 = vpop.f32.mrb[0].mxu0
    %v239 = vadd.f32 %v154, %v238
    %v240 = vpop.f32.mrb[0].mxu0
    %v241 = vpop.f32.mrb[0].mxu0
    %v242 = vpop.f32.mrb[0].mxu0
    %243 = vdwg.mxu0
    %v244 = vmax.f32 %v239, 0.0
    %v245 = vpack.c.bf16 %v244, %v244
    %v246 = vld [vmem:[#allocation5] sm:$0xf]
    %v247 = vld [vmem:[#allocation5 + $0x4] sm:$0xf]
    %v248 = vld [vmem:[#allocation5 + $0x8] sm:$0xf]
    %v249 = vld [vmem:[#allocation5 + $0xc] sm:$0xf]
    %v250 = vld [vmem:[#allocation5 + $0x10] sm:$0xf]
    %v251 = vld [vmem:[#allocation5 + $0x14] sm:$0xf]
    %v252 = vld [vmem:[#allocation5 + $0x18] sm:$0xf]
    %v253 = vld [vmem:[#allocation5 + $0x1c] sm:$0xf]
    %v254 = vld [vmem:[#allocation5 + $0x20] sm:$0xf]
    %v255 = vld [vmem:[#allocation5 + $0x24] sm:$0xf]
    %v256 = vld [vmem:[#allocation5 + $0x28] sm:$0xf]
    %v257 = vld [vmem:[#allocation5 + $0x2c] sm:$0xf]
    %v258 = vld [vmem:[#allocation5 + $0x30] sm:$0xf]
    %v259 = vld [vmem:[#allocation5 + $0x34] sm:$0xf]
    %v260 = vld [vmem:[#allocation5 + $0x38] sm:$0xf]
    %v261 = vld [vmem:[#allocation5 + $0x3c] sm:$0xf]
    %v262 = vld [vmem:[%s6] sm:$0x1]
    %v264 = vlaneseq
    %v265 = vshrl.u32 %v264, 7
    %v266 = vsub.s32 0, %v265
    %v267 = vrot.slane %v262, %v266
    %v285 = vunpack.c.l.b16 %v246
    %v286 = vunpack.c.l.b16 %v247
    %v287 = vunpack.c.l.b16 %v248
    %v288 = vunpack.c.l.b16 %v249
    %v289 = vunpack.c.l.b16 %v250
    %v290 = vunpack.c.l.b16 %v251
    %v291 = vunpack.c.l.b16 %v252
    %v292 = vunpack.c.l.b16 %v253
    %v293 = vunpack.c.l.b16 %v254
    %v294 = vunpack.c.l.b16 %v255
    %v295 = vunpack.c.l.b16 %v256
    %v296 = vunpack.c.l.b16 %v257
    %v297 = vunpack.c.l.b16 %v258
    %v298 = vunpack.c.l.b16 %v259
    %v299 = vunpack.c.l.b16 %v260
    %v300 = vunpack.c.l.b16 %v261
    %v301 = vpack.c.b16 %v286, %v285
    %v302 = vpack.c.b16 %v288, %v287
    %v303 = vpack.c.b16 %v290, %v289
    %v304 = vpack.c.b16 %v292, %v291
    %v305 = vpack.c.b16 %v294, %v293
    %v306 = vpack.c.b16 %v296, %v295
    %v307 = vpack.c.b16 %v298, %v297
    %v308 = vpack.c.b16 %v300, %v299
    %317 = vmatprep.subr.bf16.mxu0 0
    %318 = vmatpush1.bf16.msra.mxu0 %v301
    %319 = vmatprep.subr.bf16.mxu0 0
    %320 = vmatpush1.bf16.msra.mxu0 %v302
    %321 = vmatprep.subr.bf16.mxu0 0
    %322 = vmatpush1.bf16.msra.mxu0 %v303
    %323 = vmatprep.subr.bf16.mxu0 0
    %324 = vmatpush1.bf16.msra.mxu0 %v304
    %325 = vmatprep.subr.bf16.mxu0 0
    %326 = vmatpush1.bf16.msra.mxu0 %v305
    %327 = vmatprep.subr.bf16.mxu0 0
    %328 = vmatpush1.bf16.msra.mxu0 %v306
    %329 = vmatprep.subr.bf16.mxu0 0
    %330 = vmatpush1.bf16.msra.mxu0 %v307
    %331 = vmatprep.subr.bf16.mxu0 0
    %332 = vmatpush1.bf16.msra.mxu0 %v308
    %333 = vmatprep.subr.bf16.mxu0 0
    %334 = vmatpush1.bf16.msra.mxu0 0
    %335 = vmatprep.subr.bf16.mxu0 0
    %336 = vmatpush1.bf16.msra.mxu0 0
    %337 = vmatprep.subr.bf16.mxu0 0
    %338 = vmatpush1.bf16.msra.mxu0 0
    %339 = vmatprep.subr.bf16.mxu0 0
    %340 = vmatpush1.bf16.msra.mxu0 0
    %341 = vmatprep.subr.bf16.mxu0 0
    %342 = vmatpush1.bf16.msra.mxu0 0
    %343 = vmatprep.subr.bf16.mxu0 0
    %344 = vmatpush1.bf16.msra.mxu0 0
    %345 = vmatprep.subr.bf16.mxu0 0
    %346 = vmatpush1.bf16.msra.mxu0 0
    %347 = vmatprep.subr.bf16.mxu0 0
    %348 = vmatpush1.bf16.msra.mxu0 0
    %349 = vmatprep.mubr.bf16.mxu0 0
    %350 = vmatmul.mubr.bf16.gmra.mrb[0].mxu0 %v245
    %v351 = vpop.f32.mrb[0].mxu0
    %v352 = vadd.f32 %v267, %v351
    %v353 = vpop.f32.mrb[0].mxu0
    %v354 = vpop.f32.mrb[0].mxu0
    %v355 = vpop.f32.mrb[0].mxu0
    %356 = vdwg.mxu0
    %v357 = vmax.f32 %v352, 0.0
    %v358 = vpack.c.bf16 %v357, %v357
    %v359 = vld [vmem:[%s7] sm:$0xf]
    %v360 = vld [vmem:[%s7 + $0x4] sm:$0xf]
    %v361 = vld [vmem:[%s7 + $0x8] sm:$0xf]
    %v362 = vld [vmem:[%s7 + $0xc] sm:$0xf]
    %v363 = vld [vmem:[%s7 + $0x10] sm:$0xf]
    %v364 = vld [vmem:[%s7 + $0x14] sm:$0xf]
    %v365 = vld [vmem:[%s7 + $0x18] sm:$0xf]
    %v366 = vld [vmem:[%s7 + $0x1c] sm:$0xf]
    %v367 = vld [vmem:[%s7 + $0x20] sm:$0xf]
    %v368 = vld [vmem:[%s7 + $0x24] sm:$0xf]
    %v369 = vld [vmem:[%s7 + $0x28] sm:$0xf]
    %v370 = vld [vmem:[%s7 + $0x2c] sm:$0xf]
    %v371 = vld [vmem:[%s7 + $0x30] sm:$0xf]
    %v372 = vld [vmem:[%s7 + $0x34] sm:$0xf]
    %v373 = vld [vmem:[%s7 + $0x38] sm:$0xf]
    %v374 = vld [vmem:[%s7 + $0x3c] sm:$0xf]
    %v375 = vld [vmem:[%s8] sm:$0x1]
    %v377 = vlaneseq
    %v378 = vshrl.u32 %v377, 7
    %v379 = vsub.s32 0, %v378
    %v380 = vrot.slane %v375, %v379
    %v398 = vunpack.c.l.b16 %v359
    %v399 = vunpack.c.l.b16 %v360
    %v400 = vunpack.c.l.b16 %v361
    %v401 = vunpack.c.l.b16 %v362
    %v402 = vunpack.c.l.b16 %v363
    %v403 = vunpack.c.l.b16 %v364
    %v404 = vunpack.c.l.b16 %v365
    %v405 = vunpack.c.l.b16 %v366
    %v406 = vunpack.c.l.b16 %v367
    %v407 = vunpack.c.l.b16 %v368
    %v408 = vunpack.c.l.b16 %v369
    %v409 = vunpack.c.l.b16 %v370
    %v410 = vunpack.c.l.b16 %v371
    %v411 = vunpack.c.l.b16 %v372
    %v412 = vunpack.c.l.b16 %v373
    %v413 = vunpack.c.l.b16 %v374
    %v414 = vpack.c.b16 %v399, %v398
    %v415 = vpack.c.b16 %v401, %v400
    %v416 = vpack.c.b16 %v403, %v402
    %v417 = vpack.c.b16 %v405, %v404
    %v418 = vpack.c.b16 %v407, %v406
    %v419 = vpack.c.b16 %v409, %v408
    %v420 = vpack.c.b16 %v411, %v410
    %v421 = vpack.c.b16 %v413, %v412
    %430 = vmatprep.subr.bf16.mxu0 0
    %431 = vmatpush1.bf16.msra.mxu0 %v414
    %432 = vmatprep.subr.bf16.mxu0 0
    %433 = vmatpush1.bf16.msra.mxu0 %v415
    %434 = vmatprep.subr.bf16.mxu0 0
    %435 = vmatpush1.bf16.msra.mxu0 %v416
    %436 = vmatprep.subr.bf16.mxu0 0
    %437 = vmatpush1.bf16.msra.mxu0 %v417
    %438 = vmatprep.subr.bf16.mxu0 0
    %439 = vmatpush1.bf16.msra.mxu0 %v418
    %440 = vmatprep.subr.bf16.mxu0 0
    %441 = vmatpush1.bf16.msra.mxu0 %v419
    %442 = vmatprep.subr.bf16.mxu0 0
    %443 = vmatpush1.bf16.msra.mxu0 %v420
    %444 = vmatprep.subr.bf16.mxu0 0
    %445 = vmatpush1.bf16.msra.mxu0 %v421
    %446 = vmatprep.subr.bf16.mxu0 0
    %447 = vmatpush1.bf16.msra.mxu0 0
    %448 = vmatprep.subr.bf16.mxu0 0
    %449 = vmatpush1.bf16.msra.mxu0 0
    %450 = vmatprep.subr.bf16.mxu0 0
    %451 = vmatpush1.bf16.msra.mxu0 0
    %452 = vmatprep.subr.bf16.mxu0 0
    %453 = vmatpush1.bf16.msra.mxu0 0
    %454 = vmatprep.subr.bf16.mxu0 0
    %455 = vmatpush1.bf16.msra.mxu0 0
    %456 = vmatprep.subr.bf16.mxu0 0
    %457 = vmatpush1.bf16.msra.mxu0 0
    %458 = vmatprep.subr.bf16.mxu0 0
    %459 = vmatpush1.bf16.msra.mxu0 0
    %460 = vmatprep.subr.bf16.mxu0 0
    %461 = vmatpush1.bf16.msra.mxu0 0
    %462 = vmatprep.mubr.bf16.mxu0 0
    %463 = vmatmul.mubr.bf16.gmra.mrb[0].mxu0 %v358
    %v464 = vpop.f32.mrb[0].mxu0
    %v465 = vadd.f32 %v380, %v464
    %v466 = vpop.f32.mrb[0].mxu0
    %v467 = vpop.f32.mrb[0].mxu0
    %v468 = vpop.f32.mrb[0].mxu0
    %469 = vdwg.mxu0
    %vm470 = vcmask 64512
    %471 = vst.msk [vmem:[#allocation7] sm:$0xff] %vm470, %v465
    // Predicated region
    $region46: #{tpu_custom_call.1} parent=1 // pred_check
      _
    $region47: #{tpu_custom_call.1} parent=1 // pred_check_branch
      %473 = sbr.rel (0) target = $region49
    $region48: #{tpu_custom_call.1} parent=1 // pred_region
      %s475 = ssub.s32 128, 128
      %476 = vsyncadd [#allocation4], %s475
      %s478 = sshll.u32 [#allocation7], 4
      %s479 = int_to_ptr.vmem [resolvable:$true] %s478
      %481 = dma.vmem_to_hbm [thread:$0]  %s479, 128, %s9, [#allocation4]
    $region49: #{tpu_custom_call.1} parent=1 // pred_fallthru
      _
    // Predicated region
    $region50: #{tpu_custom_call.1} parent=1 // pred_check
      _
    $region51: #{tpu_custom_call.1} parent=1 // pred_check_branch
      %483 = sbr.rel (0) target = $region53
    $region52: #{tpu_custom_call.1} parent=1 // pred_region
      %484 = dma.done [#allocation4], 128
    $region53: #{tpu_custom_call.1} parent=1 // pred_fallthru
      _
    %485 = vsyncpa [#allocation3], 1
    %486 = vsyncpa [#allocation6], 1
    %487 = vsyncpa [#allocation4], 1

</llo_original>
